<compile_context>
chip_gen: v5e
topology: v5e:2x2
jax: 0.10.0
libtpu: 0.0.40
codegen_flags: <defaults>
</compile_context>

<pallas_src>
import math
from typing import Any, Callable

import jax
import jax.numpy as jnp
from jax.experimental import pallas as pl
from jax.experimental.pallas import tpu as pltpu

_LOG_2PI = math.log(2.0 * math.pi)


# ----------------------------------------------------------------------------
# Pallas kernel: log N(x; mu, diag(sigma^2)) reduced over the feature axis.
# ----------------------------------------------------------------------------
def _diag_normal_kernel(x_ref, musig_ref, const_ref, o_ref):
    # Load x in its native dtype (keeps the HBM DMA narrow), compute in f32.
    x = x_ref[...].astype(jnp.float32)              # (TB, F)
    musig = musig_ref[...]                          # (2, F) resident constants
    mu = musig[0:1, :]                              # (1, F)
    inv_sigma = musig[1:2, :]                       # (1, F)
    # TODO(synk): if profiling on v6e shows VALU co-limiting for bf16 inputs,
    # move the scale+reduce onto the (idle) MXU via the expanded-square form.
    z = (x - mu) * inv_sigma                        # broadcasts over rows
    ssq = jnp.sum(z * z, axis=-1, keepdims=True)    # (TB, 1) lane-axis reduce
    # (TB, 1) matches the natural sublane-major layout of the reduction result
    # (no XLU relayout); the constant add rides in an otherwise idle VALU slot.
    o_ref[...] = -0.5 * ssq - const_ref[0, 0]


def _pick_batch_tile(batch: int, feat: int, itemsize: int) -> int:
    """Batch-tile rows, sized in bytes (not rows).

    Targets ~2 MiB per x block: big enough to amortize the ~0.35 us per-grid-
    step overhead (>=85% of HBM roofline) on every generation, small enough
    that double-buffering (2 x 2 MiB) stays far below v5e's 16 MiB scoped-VMEM
    default and v7x's 32 MiB scoped / 64 MiB physical VMEM.
    """
    target_bytes = 2 * 1024 * 1024
    rows = target_bytes // max(1, feat * itemsize)
    rows = (max(128, min(32768, rows)) // 128) * 128
    b128 = ((batch + 127) // 128) * 128          # never tile wider than batch
    rows = min(rows, b128)

    # Megacore (v7x, 2 TCs): prefer >= 2 (ideally an even number of) tiles so
    # both cores get work on the "parallel" batch axis.
    num_tiles = (batch + rows - 1) // rows
    if num_tiles == 1 and b128 >= 256:
        rows = ((b128 // 2 + 127) // 128) * 128
    elif num_tiles > 1 and num_tiles % 2 == 1:
        cand = (((batch + num_tiles) // (num_tiles + 1) + 127) // 128) * 128
        if cand >= 128 and ((batch + cand - 1) // cand) % 2 == 0:
            rows = cand
    return rows


def diag_normal_log_prob(x: jax.Array, mu: jax.Array, sigma: jax.Array) -> jax.Array:
    """log N(x; mu, diag(sigma^2)) summed over the feature axis, via Pallas."""
    B, F = x.shape
    mu2 = jnp.asarray(mu, jnp.float32).reshape(1, F)
    sigma32 = jnp.asarray(sigma, jnp.float32).reshape(1, F)
    # mu and 1/sigma packed into one resident (2, F) constant block.
    musig = jnp.concatenate([mu2, 1.0 / sigma32], axis=0)
    # Additive constant, folded into the kernel via an SMEM scalar.
    const = (jnp.sum(jnp.log(sigma32)) + 0.5 * F * _LOG_2PI).reshape(1, 1)

    itemsize = jnp.dtype(x.dtype).itemsize
    TB = _pick_batch_tile(B, F, itemsize)
    num_tiles = pl.cdiv(B, TB)   # ragged last block handled by Pallas (no pad)

    out = pl.pallas_call(
        _diag_normal_kernel,
        out_shape=jax.ShapeDtypeStruct((B, 1), jnp.float32),
        grid_spec=pl.GridSpec(
            grid=(num_tiles,),
            in_specs=[
                pl.BlockSpec((TB, F), lambda i: (i, 0)),    # x: batch-tiled, pipelined
                pl.BlockSpec((2, F), lambda i: (0, 0)),     # [mu; 1/sigma]: resident
                pl.BlockSpec(memory_space=pltpu.MemorySpace.SMEM),  # const scalar
            ],
            out_specs=pl.BlockSpec((TB, 1), lambda i: (i, 0)),
        ),
        compiler_params=pltpu.CompilerParams(
            dimension_semantics=("parallel",),   # batch tiles shard across v7x TCs
        ),
        cost_estimate=pl.CostEstimate(
            flops=4 * B * F,
            transcendentals=0,
            bytes_accessed=B * F * itemsize + 2 * F * 4 + B * 4,
        ),
    )(x, musig, const)

    return out[:, 0]


# ----------------------------------------------------------------------------
# "Distribution" constructed by the Unconditional module (the `meta`).
# ----------------------------------------------------------------------------
class DiagNormal:
    """Diagonal Gaussian whose log_prob hot path runs in the Pallas kernel."""

    def __init__(self, loc: jax.Array, scale: jax.Array):
        self.loc = loc
        self.scale = scale

    def __repr__(self):
        return f"DiagNormal(loc: {tuple(self.loc.shape)}, scale: {tuple(self.scale.shape)})"

    def log_prob(self, x: jax.Array) -> jax.Array:
        return diag_normal_log_prob(x, self.loc, self.scale)


# ----------------------------------------------------------------------------
# JAX port of zuko.flows.core.Unconditional
# ----------------------------------------------------------------------------
class Unconditional:
    """Unconditional lazy module: forward(c) ignores c, returns meta(*args, **kwargs).

    The positional tensor arguments are stored, mirroring the torch module's
    buffer/parameter registration (`self._0, self._1, ...`).
    """

    # TODO(synk): arbitrary `meta` constructors (any torch Distribution/Transform)
    # have no generic Pallas equivalent; the canonical DiagNormal case is provided.
    def __init__(self, meta: Callable[..., Any], *args: jax.Array,
                 buffer: bool = False, **kwargs):
        self.meta = meta
        self._tensors = tuple(args)
        self.buffer = buffer
        self.kwargs = kwargs

    def __call__(self, c: jax.Array = None) -> Any:
        return self.forward(c)

    def forward(self, c: jax.Array = None) -> Any:
        # The context `c` is always ignored, exactly like the reference module.
        return self.meta(*self._tensors, **self.kwargs)


# ----------------------------------------------------------------------------
# Demo / self-test
# ----------------------------------------------------------------------------
if __name__ == "__main__":
    key = jax.random.PRNGKey(0)

    batch, features = 16, 32

    # Deterministic "parameters" (slightly non-trivial sigma so the folded
    # constant path is exercised).
    mu = jnp.zeros((features,), dtype=jnp.float32)
    sigma = jnp.full((features,), 1.5, dtype=jnp.float32)

    # Lazy unconditional base distribution.
    base = Unconditional(DiagNormal, mu, sigma, buffer=True)

    kc, kx, kx2 = jax.random.split(key, 3)
    c = jax.random.normal(kc, (batch, 8), dtype=jnp.float32)   # ignored context
    x = jax.random.normal(kx, (batch, features), dtype=jnp.float32)

    dist = base(c)                       # == base.forward(c); c is ignored
    lp = jax.block_until_ready(dist.log_prob(x))   # Pallas kernel (1 ragged tile)

    # Reference check in plain JAX.
    z = (x - mu[None, :]) / sigma[None, :]
    lp_ref = jnp.sum(-0.5 * z * z - jnp.log(sigma)[None, :] - 0.5 * _LOG_2PI, axis=-1)
    assert lp.shape == (batch,)
    assert jnp.allclose(lp, lp_ref, atol=1e-5, rtol=1e-5)

    # Second check: multi-tile grid with ragged last block + bf16 input
    # (exercises the no-pad ragged path and the in-kernel f32 upcast).
    b2 = 192
    x2 = jax.random.normal(kx2, (b2, features), dtype=jnp.bfloat16)
    lp2 = jax.block_until_ready(dist.log_prob(x2))
    x2f = x2.astype(jnp.float32)
    z2 = (x2f - mu[None, :]) / sigma[None, :]
    lp2_ref = jnp.sum(-0.5 * z2 * z2 - jnp.log(sigma)[None, :] - 0.5 * _LOG_2PI, axis=-1)
    assert lp2.shape == (b2,)
    assert jnp.allclose(lp2, lp2_ref, atol=1e-4, rtol=1e-4)

    print("KERNEL_OK")
</pallas_src>

<mosaic_0001>
module attributes {stable_mosaic.version = 11 : i64} {
  func.func @_diag_normal_kernel(%arg0: i32, %arg1: memref<128x32xf32, #tpu.memory_space<vmem>>, %arg2: memref<2x32xf32, #tpu.memory_space<vmem>>, %arg3: memref<1x1xf32, #tpu.memory_space<smem>>, %arg4: memref<128x1xf32, #tpu.memory_space<vmem>>) attributes {dimension_semantics = [#tpu.dimension_semantics<parallel>], iteration_bounds = array<i64: 1>, scalar_prefetch = 0 : i64, scratch_operands = 0 : i64, tpu.core_type = #tpu.core_type<tc>, window_params = [{transform_indices = @transform_0, window_bounds = array<i64: 128, 32>}, {pipeline_mode = #tpu.pipeline_mode<synchronous>, transform_indices = @transform_1, window_bounds = array<i64: 2, 32>}, {transform_indices = @transform_2, window_bounds = array<i64: 1, 1>}, {transform_indices = @transform_3, window_bounds = array<i64: 128, 1>}]} {
    %c0 = arith.constant 0 : index
    %c0_0 = arith.constant 0 : index
    %0 = vector.load %arg1[%c0, %c0_0] : memref<128x32xf32, #tpu.memory_space<vmem>>, vector<128x32xf32>
    %c0_1 = arith.constant 0 : index
    %c0_2 = arith.constant 0 : index
    %1 = vector.load %arg2[%c0_1, %c0_2] : memref<2x32xf32, #tpu.memory_space<vmem>>, vector<2x32xf32>
    %2 = vector.extract_strided_slice %1 {offsets = [0, 0], sizes = [1, 32], strides = [1, 1]} : vector<2x32xf32> to vector<1x32xf32>
    %3 = vector.extract_strided_slice %1 {offsets = [1, 0], sizes = [1, 32], strides = [1, 1]} : vector<2x32xf32> to vector<1x32xf32>
    %4 = vector.broadcast %2 : vector<1x32xf32> to vector<128x32xf32>
    %5 = arith.subf %0, %4 : vector<128x32xf32>
    %6 = vector.broadcast %3 : vector<1x32xf32> to vector<128x32xf32>
    %7 = arith.mulf %5, %6 : vector<128x32xf32>
    %8 = arith.mulf %7, %7 : vector<128x32xf32>
    %cst = arith.constant dense<0.000000e+00> : vector<128xf32>
    %9 = vector.multi_reduction <add>, %8, %cst [1] : vector<128x32xf32> to vector<128xf32>
    %10 = vector.shape_cast %9 : vector<128xf32> to vector<128x1xf32>
    %cst_3 = arith.constant -5.000000e-01 : f32
    %11 = vector.broadcast %cst_3 : f32 to vector<128x1xf32>
    %12 = arith.mulf %11, %10 : vector<128x1xf32>
    %c0_4 = arith.constant 0 : index
    %c0_5 = arith.constant 0 : index
    %13 = memref.load %arg3[%c0_4, %c0_5] : memref<1x1xf32, #tpu.memory_space<smem>>
    %14 = vector.broadcast %13 : f32 to vector<128x1xf32>
    %15 = arith.subf %12, %14 : vector<128x1xf32>
    %c0_6 = arith.constant 0 : index
    %c0_7 = arith.constant 0 : index
    %16 = vector.load %arg4[%c0_6, %c0_7] : memref<128x1xf32, #tpu.memory_space<vmem>>, vector<128x1xf32>
    tpu.vector_store %arg4[%c0_6, %c0_7], %15 {strides = array<i32>} : memref<128x1xf32, #tpu.memory_space<vmem>>, vector<128x1xf32>,
    return
  }
  func.func @transform_0(%arg0: i32) -> (i32, i32) {
    %c0_i32 = arith.constant 0 : i32
    %c0_i32_0 = arith.constant 0 : i32
    return %arg0, %c0_i32 : i32, i32
  }
  func.func @transform_1(%arg0: i32) -> (i32, i32) {
    %c0_i32 = arith.constant 0 : i32
    %c0_i32_0 = arith.constant 0 : i32
    %c0_i32_1 = arith.constant 0 : i32
    return %c0_i32, %c0_i32_0 : i32, i32
  }
  func.func @transform_2(%arg0: i32) -> (i32, i32) {
    %c0_i32 = arith.constant 0 : i32
    %c0_i32_0 = arith.constant 0 : i32
    %c0_i32_1 = arith.constant 0 : i32
    return %c0_i32, %c0_i32_0 : i32, i32
  }
  func.func @transform_3(%arg0: i32) -> (i32, i32) {
    %c0_i32 = arith.constant 0 : i32
    %c0_i32_0 = arith.constant 0 : i32
    return %arg0, %c0_i32 : i32, i32
  }
}

</mosaic_0001>

<llo_original>
// kernel: tpu_custom_call.1
$region0: #{tpu_custom_call.1}
  #allocation0 [shape = 'u32[]', space=smem, size = 0x4, offset = 0x4, fixed_abs, tag = 'smem constant byte address 0x4 - core index']
  #allocation1 [shape = 'u32[72,128]{1,0:T(1,128)}', space=vmem, size = 0x9000, scoped, tag = 'internal scratch']
  #allocation2 [shape = 'f32[1,1]{1,0:T(1,128)S(6)}', space=smem, size = 0x200, scoped, tag = 'scoped memory for tpu_custom_call.1']
  %s0 = inlined_call_operand.hbm [shape: f32[16,32], index: 0, kind: input, shape index: {}]
  %s1 = inlined_call_operand.vmem [shape: f32[2,32], index: 1, kind: input, shape index: {}]
  %s2 = inlined_call_operand.<no memory space> [shape: f32[1,1], index: 2, kind: input, shape index: {}]
  %s3 = inlined_call_operand.vmem [shape: f32[16,1], index: 3, kind: output, shape index: {}]
  %s4 = sld [smem:[#allocation0]]
  $region60: #{tpu_custom_call.1} parent=0
    _
  %s6 = ssub.s32 1, %s4
  %s7 = scalar_select 0, %s6, %s4
  %8 = sst [smem:[#allocation2]] %s2
  $region1: #{tpu_custom_call.1} parent=0
    #allocation3 [shape = 'u8[65536]{0}', space=vmem, size = 0x10000, scoped, tag = 'input window, operand 0, single buffered']
    #allocation4 [shape = 's32[1]{0}', space=sflag, size = 0x4, scoped, tag = 'scoped memory for tpu_custom_call.1']
    #allocation5 [shape = 'u8[65536]{0}', space=vmem, size = 0x10000, scoped, tag = 'output window, operand 0, single buffered']
    %9 = vsyncpa [#allocation4], 0
    // Predicated region
    $region2: #{tpu_custom_call.1} parent=1 // pred_check
      _
    $region3: #{tpu_custom_call.1} parent=1 // pred_check_branch
      %11 = sbr.rel (0) target = $region5
    $region4: #{tpu_custom_call.1} parent=1 // pred_region
      %13 = vsyncadd [#allocation4], 1792
      %s14 = sshll.u32 %s0, 4
      %s15 = int_to_ptr.hbm [resolvable:$true] %s14
      %s16 = sshll.u32 [#allocation3], 4
      %s17 = int_to_ptr.vmem [resolvable:$true] %s16
      %22 = dma.hbm_to_vmem [thread:$0]  %s15, 256, %s17, [#allocation4], 128, 128, 8
    $region5: #{tpu_custom_call.1} parent=1 // pred_fallthru
      _
    // Predicated region
    $region6: #{tpu_custom_call.1} parent=1 // pred_check
      _
    $region7: #{tpu_custom_call.1} parent=1 // pred_check_branch
      %24 = sbr.rel (0) target = $region9
    $region8: #{tpu_custom_call.1} parent=1 // pred_region
      _
    $region9: #{tpu_custom_call.1} parent=1 // pred_fallthru
      _
    // Predicated region
    $region10: #{tpu_custom_call.1} parent=1 // pred_check
      _
    $region11: #{tpu_custom_call.1} parent=1 // pred_check_branch
      %26 = sbr.rel (0) target = $region13
    $region12: #{tpu_custom_call.1} parent=1 // pred_region
      _
    $region13: #{tpu_custom_call.1} parent=1 // pred_fallthru
      _
    // Predicated region
    $region14: #{tpu_custom_call.1} parent=1 // pred_check
      _
    $region15: #{tpu_custom_call.1} parent=1 // pred_check_branch
      %28 = sbr.rel (0) target = $region17
    $region16: #{tpu_custom_call.1} parent=1 // pred_region
      %30 = dma.done [#allocation4], 2048
    $region17: #{tpu_custom_call.1} parent=1 // pred_fallthru
      _
    %v31 = vld [vmem:[#allocation3] sm:$0xff]
    %v32 = vld [vmem:[#allocation3 + $0x8] sm:$0xff]
    %v33 = vld [vmem:[#allocation3 + $0x10] sm:$0xff]
    %v34 = vld [vmem:[#allocation3 + $0x18] sm:$0xff]
    %v35 = vld [vmem:[#allocation3 + $0x20] sm:$0xff]
    %v36 = vld [vmem:[#allocation3 + $0x28] sm:$0xff]
    %v37 = vld [vmem:[#allocation3 + $0x30] sm:$0xff]
    %v38 = vld [vmem:[#allocation3 + $0x38] sm:$0xff]
    %v39 = vld [vmem:[#allocation3 + $0x40] sm:$0xff]
    %v40 = vld [vmem:[#allocation3 + $0x48] sm:$0xff]
    %v41 = vld [vmem:[#allocation3 + $0x50] sm:$0xff]
    %v42 = vld [vmem:[#allocation3 + $0x58] sm:$0xff]
    %v43 = vld [vmem:[#allocation3 + $0x60] sm:$0xff]
    %v44 = vld [vmem:[#allocation3 + $0x68] sm:$0xff]
    %v45 = vld [vmem:[#allocation3 + $0x70] sm:$0xff]
    %v46 = vld [vmem:[#allocation3 + $0x78] sm:$0xff]
    %v47 = vld [vmem:[%s1] sm:$0x3]
    %v48 = vperm.slane %v47, 0
    %v49 = vsub.f32 %v31, %v48
    %v50 = vsub.f32 %v32, %v48
    %v51 = vsub.f32 %v33, %v48
    %v52 = vsub.f32 %v34, %v48
    %v53 = vsub.f32 %v35, %v48
    %v54 = vsub.f32 %v36, %v48
    %v55 = vsub.f32 %v37, %v48
    %v56 = vsub.f32 %v38, %v48
    %v57 = vsub.f32 %v39, %v48
    %v58 = vsub.f32 %v40, %v48
    %v59 = vsub.f32 %v41, %v48
    %v60 = vsub.f32 %v42, %v48
    %v61 = vsub.f32 %v43, %v48
    %v62 = vsub.f32 %v44, %v48
    %v63 = vsub.f32 %v45, %v48
    %v64 = vsub.f32 %v46, %v48
    %v65 = vperm.slane %v47, 1
    %v66 = vmul.f32 %v49, %v65
    %v67 = vmul.f32 %v50, %v65
    %v68 = vmul.f32 %v51, %v65
    %v69 = vmul.f32 %v52, %v65
    %v70 = vmul.f32 %v53, %v65
    %v71 = vmul.f32 %v54, %v65
    %v72 = vmul.f32 %v55, %v65
    %v73 = vmul.f32 %v56, %v65
    %v74 = vmul.f32 %v57, %v65
    %v75 = vmul.f32 %v58, %v65
    %v76 = vmul.f32 %v59, %v65
    %v77 = vmul.f32 %v60, %v65
    %v78 = vmul.f32 %v61, %v65
    %v79 = vmul.f32 %v62, %v65
    %v80 = vmul.f32 %v63, %v65
    %v81 = vmul.f32 %v64, %v65
    %v82 = vmul.f32 %v66, %v66
    %v83 = vmul.f32 %v67, %v67
    %v84 = vmul.f32 %v68, %v68
    %v85 = vmul.f32 %v69, %v69
    %v86 = vmul.f32 %v70, %v70
    %v87 = vmul.f32 %v71, %v71
    %v88 = vmul.f32 %v72, %v72
    %v89 = vmul.f32 %v73, %v73
    %v90 = vmul.f32 %v74, %v74
    %v91 = vmul.f32 %v75, %v75
    %v92 = vmul.f32 %v76, %v76
    %v93 = vmul.f32 %v77, %v77
    %v94 = vmul.f32 %v78, %v78
    %v95 = vmul.f32 %v79, %v79
    %v96 = vmul.f32 %v80, %v80
    %v97 = vmul.f32 %v81, %v81
    %vm98 = vcmask 261120
    %v99 = vsel %vm98, %v82, 0.0
    %100 = vadd.xlane.f32.xlu0 %v99
    %v101 = vpop.xlane.xlu0 %100
    %v102 = vsel %vm98, %v83, 0.0
    %103 = vadd.xlane.f32.xlu0 %v102
    %v104 = vpop.xlane.xlu0 %103
    %v105 = vsel %vm98, %v84, 0.0
    %106 = vadd.xlane.f32.xlu0 %v105
    %v107 = vpop.xlane.xlu0 %106
    %v108 = vsel %vm98, %v85, 0.0
    %109 = vadd.xlane.f32.xlu0 %v108
    %v110 = vpop.xlane.xlu0 %109
    %v111 = vsel %vm98, %v86, 0.0
    %112 = vadd.xlane.f32.xlu0 %v111
    %v113 = vpop.xlane.xlu0 %112
    %v114 = vsel %vm98, %v87, 0.0
    %115 = vadd.xlane.f32.xlu0 %v114
    %v116 = vpop.xlane.xlu0 %115
    %v117 = vsel %vm98, %v88, 0.0
    %118 = vadd.xlane.f32.xlu0 %v117
    %v119 = vpop.xlane.xlu0 %118
    %v120 = vsel %vm98, %v89, 0.0
    %121 = vadd.xlane.f32.xlu0 %v120
    %v122 = vpop.xlane.xlu0 %121
    %v123 = vsel %vm98, %v90, 0.0
    %124 = vadd.xlane.f32.xlu0 %v123
    %v125 = vpop.xlane.xlu0 %124
    %v126 = vsel %vm98, %v91, 0.0
    %127 = vadd.xlane.f32.xlu0 %v126
    %v128 = vpop.xlane.xlu0 %127
    %v129 = vsel %vm98, %v92, 0.0
    %130 = vadd.xlane.f32.xlu0 %v129
    %v131 = vpop.xlane.xlu0 %130
    %v132 = vsel %vm98, %v93, 0.0
    %133 = vadd.xlane.f32.xlu0 %v132
    %v134 = vpop.xlane.xlu0 %133
    %v135 = vsel %vm98, %v94, 0.0
    %136 = vadd.xlane.f32.xlu0 %v135
    %v137 = vpop.xlane.xlu0 %136
    %v138 = vsel %vm98, %v95, 0.0
    %139 = vadd.xlane.f32.xlu0 %v138
    %v140 = vpop.xlane.xlu0 %139
    %v141 = vsel %vm98, %v96, 0.0
    %142 = vadd.xlane.f32.xlu0 %v141
    %v143 = vpop.xlane.xlu0 %142
    %v144 = vsel %vm98, %v97, 0.0
    %145 = vadd.xlane.f32.xlu0 %v144
    %v146 = vpop.xlane.xlu0 %145
    %v147 = vmul.f32 %v101, -0.5
    %v148 = vmul.f32 %v104, -0.5
    %v149 = vmul.f32 %v107, -0.5
    %v150 = vmul.f32 %v110, -0.5
    %v151 = vmul.f32 %v113, -0.5
    %v152 = vmul.f32 %v116, -0.5
    %v153 = vmul.f32 %v119, -0.5
    %v154 = vmul.f32 %v122, -0.5
    %v155 = vmul.f32 %v125, -0.5
    %v156 = vmul.f32 %v128, -0.5
    %v157 = vmul.f32 %v131, -0.5
    %v158 = vmul.f32 %v134, -0.5
    %v159 = vmul.f32 %v137, -0.5
    %v160 = vmul.f32 %v140, -0.5
    %v161 = vmul.f32 %v143, -0.5
    %v162 = vmul.f32 %v146, -0.5
    %s163 = sld [smem:[#allocation2]]
    %v164 = vstv %s163
    %v165 = vsub.f32 %v147, %v164
    %v166 = vsub.f32 %v148, %v164
    %v167 = vsub.f32 %v149, %v164
    %v168 = vsub.f32 %v150, %v164
    %v169 = vsub.f32 %v151, %v164
    %v170 = vsub.f32 %v152, %v164
    %v171 = vsub.f32 %v153, %v164
    %v172 = vsub.f32 %v154, %v164
    %v173 = vsub.f32 %v155, %v164
    %v174 = vsub.f32 %v156, %v164
    %v175 = vsub.f32 %v157, %v164
    %v176 = vsub.f32 %v158, %v164
    %v177 = vsub.f32 %v159, %v164
    %v178 = vsub.f32 %v160, %v164
    %v179 = vsub.f32 %v161, %v164
    %v180 = vsub.f32 %v162, %v164
    %vm181 = vcmask 7168
    %182 = vst.msk [vmem:[#allocation5] sm:$0xff] %vm181, %v165
    %183 = vst.msk [vmem:[#allocation5 + $0x8] sm:$0xff] %vm181, %v166
    %184 = vst.msk [vmem:[#allocation5 + $0x10] sm:$0xff] %vm181, %v167
    %185 = vst.msk [vmem:[#allocation5 + $0x18] sm:$0xff] %vm181, %v168
    %186 = vst.msk [vmem:[#allocation5 + $0x20] sm:$0xff] %vm181, %v169
    %187 = vst.msk [vmem:[#allocation5 + $0x28] sm:$0xff] %vm181, %v170
    %188 = vst.msk [vmem:[#allocation5 + $0x30] sm:$0xff] %vm181, %v171
    %189 = vst.msk [vmem:[#allocation5 + $0x38] sm:$0xff] %vm181, %v172
    %190 = vst.msk [vmem:[#allocation5 + $0x40] sm:$0xff] %vm181, %v173
    %191 = vst.msk [vmem:[#allocation5 + $0x48] sm:$0xff] %vm181, %v174
    %192 = vst.msk [vmem:[#allocation5 + $0x50] sm:$0xff] %vm181, %v175
    %193 = vst.msk [vmem:[#allocation5 + $0x58] sm:$0xff] %vm181, %v176
    %194 = vst.msk [vmem:[#allocation5 + $0x60] sm:$0xff] %vm181, %v177
    %195 = vst.msk [vmem:[#allocation5 + $0x68] sm:$0xff] %vm181, %v178
    %196 = vst.msk [vmem:[#allocation5 + $0x70] sm:$0xff] %vm181, %v179
    %197 = vst.msk [vmem:[#allocation5 + $0x78] sm:$0xff] %vm181, %v180
    // Predicated region
    $region18: #{tpu_custom_call.1} parent=1 // pred_check
      _
    $region19: #{tpu_custom_call.1} parent=1 // pred_check_branch
      %199 = sbr.rel (0) target = $region21
    $region20: #{tpu_custom_call.1} parent=1 // pred_region
      // Predicated region
      $region22: #{tpu_custom_call.1} parent=20 // pred_check
        _
      $region23: #{tpu_custom_call.1} parent=20 // pred_check_branch
        %201 = sbr.rel (0) target = $region25
      $region24: #{tpu_custom_call.1} parent=20 // pred_region
        // Predicated region
        $region26: #{tpu_custom_call.1} parent=24 // pred_check
          _
        $region27: #{tpu_custom_call.1} parent=24 // pred_check_branch
          %203 = sbr.rel (0) target = $region29
        $region28: #{tpu_custom_call.1} parent=24 // pred_region
          // Predicated region
          $region41: #{tpu_custom_call.1} parent=28 // pred_check
            _
          $region42: #{tpu_custom_call.1} parent=28 // pred_check_branch
            %221 = sbr.rel (0) target = $region44
          $region43: #{tpu_custom_call.1} parent=28 // pred_region
            loop: start=0, step=1, limit=1
            $region45: #{tpu_custom_call.1} parent=43 // loop_pre_header
              _
            $region46: #{tpu_custom_call.1} parent=43 // loop_header
              %s223 = sphi 0, %s227
              %p224 = scmp.ge.s32.totalorder %s223, 1
              %s228 = sphi [#allocation5], [#allocation5]
              %s229 = sphi %s3, %s3
            $region47: #{tpu_custom_call.1} parent=43 // loop_header_branch
              %226 = sbr.rel (%p224) target = $region51
            $region48: #{tpu_custom_call.1} parent=43 // loop_body
              %v230 = vld [vmem:[%s228] sm:$0xff]
              %231 = vst [vmem:[%s229] sm:$0xff] %v230
              %v232 = vld [vmem:[%s228 + $0x8] sm:$0xff]
              %233 = vst [vmem:[%s229 + $0x8] sm:$0xff] %v232
            $region49: #{tpu_custom_call.1} parent=43 // loop_footer
              %s227 = sadd.s32 1, %s223
            $region50: #{tpu_custom_call.1} parent=43 // loop_footer_branch
              %222 = sbr.rel target = $region46
            $region51: #{tpu_custom_call.1} parent=43 // loop_exit
              _
          $region44: #{tpu_custom_call.1} parent=28 // pred_fallthru
            _
          // Predicated region
          $region52: #{tpu_custom_call.1} parent=28 // pred_check
            _
          $region53: #{tpu_custom_call.1} parent=28 // pred_check_branch
            %235 = sbr.rel target = $region55
          $region54: #{tpu_custom_call.1} parent=28 // pred_region
            _
          $region55: #{tpu_custom_call.1} parent=28 // pred_fallthru
            _
        $region29: #{tpu_custom_call.1} parent=24 // pred_fallthru
          _
        // Predicated region
        $region30: #{tpu_custom_call.1} parent=24 // pred_check
          _
        $region31: #{tpu_custom_call.1} parent=24 // pred_check_branch
          %205 = sbr.rel target = $region33
        $region32: #{tpu_custom_call.1} parent=24 // pred_region
          %s207 = ssub.s32 256, 1
          loop: start=0, step=1, limit=1
          $region34: #{tpu_custom_call.1} parent=32 // loop_pre_header
            _
          $region35: #{tpu_custom_call.1} parent=32 // loop_header
            %s209 = sphi 0, %s213
            %p210 = scmp.ge.s32.totalorder %s209, 1
            %s214 = sphi [#allocation5], [#allocation5]
            %s215 = sphi %s3, %s3
          $region36: #{tpu_custom_call.1} parent=32 // loop_header_branch
            %212 = sbr.rel (%p210) target = $region40
          $region37: #{tpu_custom_call.1} parent=32 // loop_body
            %v216 = vld [vmem:[%s214] sm:%s207]
            %217 = vst [vmem:[%s215] sm:%s207] %v216
            %v218 = vld [vmem:[%s214 + $0x8] sm:%s207]
            %219 = vst [vmem:[%s215 + $0x8] sm:%s207] %v218
          $region38: #{tpu_custom_call.1} parent=32 // loop_footer
            %s213 = sadd.s32 1, %s209
          $region39: #{tpu_custom_call.1} parent=32 // loop_footer_branch
            %208 = sbr.rel target = $region35
          $region40: #{tpu_custom_call.1} parent=32 // loop_exit
            _
        $region33: #{tpu_custom_call.1} parent=24 // pred_fallthru
          _
      $region25: #{tpu_custom_call.1} parent=20 // pred_fallthru
        _
      %236 = vnop
    $region21: #{tpu_custom_call.1} parent=1 // pred_fallthru
      _
    // Predicated region
    $region56: #{tpu_custom_call.1} parent=1 // pred_check
      _
    $region57: #{tpu_custom_call.1} parent=1 // pred_check_branch
      %238 = sbr.rel (0) target = $region59
    $region58: #{tpu_custom_call.1} parent=1 // pred_region
      _
    $region59: #{tpu_custom_call.1} parent=1 // pred_fallthru
      _
    %239 = vsyncpa [#allocation4], 1

</llo_original>
